<compile_context>
chip_gen: v7x
topology: tpu7x:2x2x1
jax: 0.10.0
libtpu: 0.0.40
codegen_flags: <defaults>
</compile_context>

<pallas_src>
import functools

import jax
import jax.numpy as jnp
from jax.experimental import pallas as pl
from jax.experimental.pallas import tpu as pltpu


def mlp_fused_kernel(x_ref, w_ref, b_ref, o_ref):
    # (tb, M) @ (M, P) -> f32 accumulator on the MXU.
    acc = jnp.dot(x_ref[...], w_ref[...], preferred_element_type=jnp.float32)
    acc = acc + b_ref[...]                     # (1, P) f32 broadcast add
    o_ref[...] = jax.nn.sigmoid(acc).astype(o_ref.dtype)


def _round_up(x, m):
    return ((x + m - 1) // m) * m


def _pick_tb(batch, row_align):
    """Batch-tile rows: sublane aligned, capped at 512 rows, and (when the
    batch allows) >=2 grid steps so v7x's two TensorCores both get work."""
    tb = min(512, _round_up(batch, row_align))
    if batch >= 4 * row_align:                 # room for at least two tiles
        tb = min(tb, _round_up(pl.cdiv(batch, 2), row_align))
    return tb


@functools.partial(jax.jit, static_argnames=("compute_dtype",))
def mlp_forward(x, w1_t, b1, w2_t, b2, *, compute_dtype=jnp.bfloat16):
    """x: (B, meta_size); w1_t: (meta_size, P); w2_t: (P, P); b*: (1, P).

    Weights are stored pre-transposed ((in, out) layout) so the kernel does a
    plain x @ W.  Because the module has no activation between the two Linear
    layers, they are fused into one affine map here; this halves MXU work and
    halves resident-weight VMEM / DMA traffic.
    """
    B, M = x.shape
    P = w1_t.shape[1]
    out_dtype = x.dtype

    # ---- algebraic fusion of the two linears (done in f32 for accuracy) ----
    w_fused = jnp.dot(w1_t.astype(jnp.float32), w2_t.astype(jnp.float32))    # (M, P)
    b_fused = (jnp.dot(b1.astype(jnp.float32), w2_t.astype(jnp.float32))
               + b2.astype(jnp.float32))                                     # (1, P)

    # ---- dtype + batch tiling ----
    row_align = 16 if jnp.dtype(compute_dtype).itemsize == 2 else 8
    tb = _pick_tb(B, row_align)
    B_pad = _round_up(B, tb)

    x_c = x.astype(compute_dtype)
    if B_pad != B:
        x_c = jnp.pad(x_c, ((0, B_pad - B), (0, 0)))
    w_c = w_fused.astype(compute_dtype)

    grid = (B_pad // tb,)
    out = pl.pallas_call(
        mlp_fused_kernel,
        out_shape=jax.ShapeDtypeStruct((B_pad, P), out_dtype),
        grid_spec=pltpu.PrefetchScalarGridSpec(
            num_scalar_prefetch=0,
            grid=grid,
            in_specs=[
                pl.BlockSpec((tb, M), lambda i: (i, 0)),   # x batch tile
                pl.BlockSpec((M, P), lambda i: (0, 0)),    # fused weight (resident, bf16)
                pl.BlockSpec((1, P), lambda i: (0, 0)),    # fused bias   (resident, f32)
            ],
            out_specs=pl.BlockSpec((tb, P), lambda i: (i, 0)),
        ),
        compiler_params=pltpu.CompilerParams(
            dimension_semantics=("parallel",)),
    )(x_c, w_c, b_fused)

    return out[:B]


def init_linear_params(key, in_features, out_features, dtype=jnp.float32):
    """Deterministic init mimicking torch.nn.Linear default (uniform +-1/sqrt(in)).
    Weight is returned already transposed to (in_features, out_features)."""
    kw, kb = jax.random.split(key)
    bound = 1.0 / (in_features ** 0.5)
    w_t = jax.random.uniform(kw, (in_features, out_features), dtype,
                             minval=-bound, maxval=bound)
    b = jax.random.uniform(kb, (1, out_features), dtype,
                           minval=-bound, maxval=bound)
    return w_t, b


if __name__ == "__main__":
    meta_size = 32     # Linear #1 in_features
    params_size = 128  # Linear #1 out_features == Linear #2 in/out features
    batch = 8

    key = jax.random.PRNGKey(0)
    kx, k1, k2 = jax.random.split(key, 3)

    x = jax.random.normal(kx, (batch, meta_size), jnp.float32)
    w1_t, b1 = init_linear_params(k1, meta_size, params_size)
    w2_t, b2 = init_linear_params(k2, params_size, params_size)

    out = mlp_forward(x, w1_t, b1, w2_t, b2)
    out = jax.block_until_ready(out)

    # Pure-JAX reference of the original two-Linear + Sigmoid forward.
    ref = jax.nn.sigmoid((x @ w1_t + b1) @ w2_t + b2)
    assert out.shape == (batch, params_size)
    # bf16 operands with f32 accumulation -> relaxed tolerance.
    assert jnp.allclose(out, ref, atol=2e-2, rtol=2e-2), \
        float(jnp.max(jnp.abs(out - ref)))

    print("KERNEL_OK")
</pallas_src>

<mosaic_0001>
module attributes {stable_mosaic.version = 11 : i64} {
  func.func @mlp_fused_kernel(%arg0: i32, %arg1: memref<16x32xbf16, #tpu.memory_space<vmem>>, %arg2: memref<32x128xbf16, #tpu.memory_space<vmem>>, %arg3: memref<1x128xf32, #tpu.memory_space<vmem>>, %arg4: memref<16x128xf32, #tpu.memory_space<vmem>>) attributes {dimension_semantics = [#tpu.dimension_semantics<parallel>], iteration_bounds = array<i64: 1>, scalar_prefetch = 0 : i64, scratch_operands = 0 : i64, tpu.core_type = #tpu.core_type<tc>, window_params = [{transform_indices = @transform_0, window_bounds = array<i64: 16, 32>}, {pipeline_mode = #tpu.pipeline_mode<synchronous>, transform_indices = @transform_1, window_bounds = array<i64: 32, 128>}, {pipeline_mode = #tpu.pipeline_mode<synchronous>, transform_indices = @transform_2, window_bounds = array<i64: 1, 128>}, {transform_indices = @transform_3, window_bounds = array<i64: 16, 128>}]} {
    %c0 = arith.constant 0 : index
    %c0_0 = arith.constant 0 : index
    %0 = vector.load %arg1[%c0, %c0_0] : memref<16x32xbf16, #tpu.memory_space<vmem>>, vector<16x32xbf16>
    %c0_1 = arith.constant 0 : index
    %c0_2 = arith.constant 0 : index
    %1 = vector.load %arg2[%c0_1, %c0_2] : memref<32x128xbf16, #tpu.memory_space<vmem>>, vector<32x128xbf16>
    %cst = arith.constant dense<0.000000e+00> : vector<16x128xf32>
    %2 = tpu.matmul %0, %1, %cst {dimension_numbers = #tpu.dot_dimension_numbers<[1], [0], [0], [1], [0, 0, 1, 1], [], []>} : vector<16x32xbf16>, vector<32x128xbf16>, vector<16x128xf32> -> vector<16x128xf32>
    %c0_3 = arith.constant 0 : index
    %c0_4 = arith.constant 0 : index
    %3 = vector.load %arg3[%c0_3, %c0_4] : memref<1x128xf32, #tpu.memory_space<vmem>>, vector<1x128xf32>
    %4 = vector.broadcast %3 : vector<1x128xf32> to vector<16x128xf32>
    %5 = arith.addf %2, %4 : vector<16x128xf32>
    %6 = arith.negf %5 : vector<16x128xf32>
    %7 = math.exp %6 : vector<16x128xf32>
    %cst_5 = arith.constant 1.000000e+00 : f32
    %8 = vector.broadcast %cst_5 : f32 to vector<16x128xf32>
    %9 = arith.addf %8, %7 : vector<16x128xf32>
    %10 = arith.divf %8, %9 : vector<16x128xf32>
    %c0_6 = arith.constant 0 : index
    %c0_7 = arith.constant 0 : index
    %11 = vector.load %arg4[%c0_6, %c0_7] : memref<16x128xf32, #tpu.memory_space<vmem>>, vector<16x128xf32>
    tpu.vector_store %arg4[%c0_6, %c0_7], %10 {strides = array<i32>} : memref<16x128xf32, #tpu.memory_space<vmem>>, vector<16x128xf32>,
    return
  }
  func.func @transform_0(%arg0: i32) -> (i32, i32) {
    %c0_i32 = arith.constant 0 : i32
    %c0_i32_0 = arith.constant 0 : i32
    return %arg0, %c0_i32 : i32, i32
  }
  func.func @transform_1(%arg0: i32) -> (i32, i32) {
    %c0_i32 = arith.constant 0 : i32
    %c0_i32_0 = arith.constant 0 : i32
    %c0_i32_1 = arith.constant 0 : i32
    return %c0_i32, %c0_i32_0 : i32, i32
  }
  func.func @transform_2(%arg0: i32) -> (i32, i32) {
    %c0_i32 = arith.constant 0 : i32
    %c0_i32_0 = arith.constant 0 : i32
    %c0_i32_1 = arith.constant 0 : i32
    return %c0_i32, %c0_i32_0 : i32, i32
  }
  func.func @transform_3(%arg0: i32) -> (i32, i32) {
    %c0_i32 = arith.constant 0 : i32
    %c0_i32_0 = arith.constant 0 : i32
    return %arg0, %c0_i32 : i32, i32
  }
}

</mosaic_0001>

<llo_original>
// kernel: mlp_forward.1
$region0: #{mlp_forward.1}
  #allocation0 [shape = 'u32[]', space=smem, size = 0x4, offset = 0x4, fixed_abs, tag = 'smem constant byte address 0x4 - core index']
  #allocation1 [shape = 'u32[144,128]{1,0:T(1,128)}', space=vmem, size = 0x12000, scoped, tag = 'internal scratch']
  %s0 = inlined_call_operand.vmem [shape: bf16[16,32], index: 0, kind: input, shape index: {}]
  %s1 = inlined_call_operand.vmem [shape: bf16[32,128], index: 1, kind: input, shape index: {}]
  %s2 = inlined_call_operand.vmem [shape: f32[1,128], index: 2, kind: input, shape index: {}]
  %s3 = inlined_call_operand.vmem [shape: f32[16,128], index: 3, kind: output, shape index: {}]
  %s4 = sld [smem:[#allocation0]]
  $region22: #{mlp_forward.1} parent=0
    _
  %s6 = ssub.s32 1, %s4
  %s7 = scalar_select 0, %s6, %s4
  // Predicated region
  $region2: #{mlp_forward.1} parent=0 // pred_check
    _
  $region3: #{mlp_forward.1} parent=0 // pred_check_branch
    %9 = sbr.rel (0) target = $region5
  $region4: #{mlp_forward.1} parent=0 // pred_region
    _
  $region5: #{mlp_forward.1} parent=0 // pred_fallthru
    _
  // Predicated region
  $region6: #{mlp_forward.1} parent=0 // pred_check
    _
  $region7: #{mlp_forward.1} parent=0 // pred_check_branch
    %11 = sbr.rel (0) target = $region9
  $region8: #{mlp_forward.1} parent=0 // pred_region
    _
  $region9: #{mlp_forward.1} parent=0 // pred_fallthru
    _
  // Predicated region
  $region10: #{mlp_forward.1} parent=0 // pred_check
    _
  $region11: #{mlp_forward.1} parent=0 // pred_check_branch
    %13 = sbr.rel (0) target = $region13
  $region12: #{mlp_forward.1} parent=0 // pred_region
    _
  $region13: #{mlp_forward.1} parent=0 // pred_fallthru
    _
  %v15 = vld [vmem:[%s0] sm:$0xf]
  %v16 = vld [vmem:[%s0 + $0x4] sm:$0xf]
  %v17 = vld [vmem:[%s1] sm:$0xf]
  %v18 = vld [vmem:[%s1 + $0x4] sm:$0xf]
  %v19 = vld [vmem:[%s1 + $0x8] sm:$0xf]
  %v20 = vld [vmem:[%s1 + $0xc] sm:$0xf]
  %v21 = vld [vmem:[%s2] sm:$0x1]
  %v23 = vlaneseq
  %v24 = vshrl.u32 %v23, 7
  %v25 = vsub.s32 0, %v24
  %v26 = vrot.slane %v21, %v25
  %v30 = vunpack.c.l.b16 %v15
  %v31 = vunpack.c.l.b16 %v16
  %v32 = vpack.c.b16 %v31, %v30
  %v37 = vunpack.c.l.b16 %v17
  %v38 = vunpack.c.l.b16 %v18
  %v39 = vunpack.c.l.b16 %v19
  %v40 = vunpack.c.l.b16 %v20
  %v41 = vpack.c.b16 %v38, %v37
  %v42 = vpack.c.b16 %v40, %v39
  %vm45 = vcmask 261120
  %v47 = vsel %vm45, %v32, 0
  %49 = vmatprep.subr.bf16.mxu0 0
  %50 = vmatpush1.bf16.msra.mxu0 %v41
  %51 = vmatprep.subr.bf16.mxu0 0
  %52 = vmatpush1.bf16.msra.mxu0 %v42
  %53 = vmatprep.subr.bf16.mxu0 0
  %54 = vmatpush1.bf16.msra.mxu0 0
  %55 = vmatprep.subr.bf16.mxu0 0
  %56 = vmatpush1.bf16.msra.mxu0 0
  %57 = vmatprep.subr.bf16.mxu0 0
  %58 = vmatpush1.bf16.msra.mxu0 0
  %59 = vmatprep.subr.bf16.mxu0 0
  %60 = vmatpush1.bf16.msra.mxu0 0
  %61 = vmatprep.subr.bf16.mxu0 0
  %62 = vmatpush1.bf16.msra.mxu0 0
  %63 = vmatprep.subr.bf16.mxu0 0
  %64 = vmatpush1.bf16.msra.mxu0 0
  %65 = vmatprep.subr.bf16.mxu0 0
  %66 = vmatpush1.bf16.msra.mxu0 0
  %67 = vmatprep.subr.bf16.mxu0 0
  %68 = vmatpush1.bf16.msra.mxu0 0
  %69 = vmatprep.subr.bf16.mxu0 0
  %70 = vmatpush1.bf16.msra.mxu0 0
  %71 = vmatprep.subr.bf16.mxu0 0
  %72 = vmatpush1.bf16.msra.mxu0 0
  %73 = vmatprep.subr.bf16.mxu0 0
  %74 = vmatpush1.bf16.msra.mxu0 0
  %75 = vmatprep.subr.bf16.mxu0 0
  %76 = vmatpush1.bf16.msra.mxu0 0
  %77 = vmatprep.subr.bf16.mxu0 0
  %78 = vmatpush1.bf16.msra.mxu0 0
  %79 = vmatprep.subr.bf16.mxu0 0
  %80 = vmatpush1.bf16.msra.mxu0 0
  %81 = vmatprep.mubr.bf16.mxu0 0
  %82 = vmatmul.mubr.bf16.gmra.mrb[0].mxu0 %v47
  %v83 = vpop.f32.mrb[0].mxu0
  %v84 = vadd.f32 %v26, %v83
  %v85 = vpop.f32.mrb[0].mxu0
  %v86 = vpop.f32.mrb[0].mxu0
  %v87 = vadd.f32 %v26, %v86
  %v88 = vpop.f32.mrb[0].mxu0
  %89 = vdwg.mxu0
  %v90 = vxor.u32 %v84, 2147483648
  %v91 = vxor.u32 %v87, 2147483648
  %v92 = vmul.f32 %v90, 1.442695
  %v93 = vpow.pop %v92
  %v94 = vmul.f32 %v91, 1.442695
  %v95 = vpow.pop %v94
  %v96 = vadd.f32 %v93, 1.0
  %v97 = vadd.f32 %v95, 1.0
  %v98 = vrcp.pop %v96
  %v99 = vmul.f32 1.0, %v98
  %v100 = vrcp.pop %v97
  %v101 = vmul.f32 1.0, %v100
  %102 = vst [vmem:[%s3] sm:$0xff] %v99
  %103 = vst [vmem:[%s3 + $0x8] sm:$0xff] %v101
  // Predicated region
  $region14: #{mlp_forward.1} parent=0 // pred_check
    _
  $region15: #{mlp_forward.1} parent=0 // pred_check_branch
    %105 = sbr.rel (0) target = $region17
  $region16: #{mlp_forward.1} parent=0 // pred_region
    _
  $region17: #{mlp_forward.1} parent=0 // pred_fallthru
    _
  // Predicated region
  $region18: #{mlp_forward.1} parent=0 // pred_check
    _
  $region19: #{mlp_forward.1} parent=0 // pred_check_branch
    %107 = sbr.rel (0) target = $region21
  $region20: #{mlp_forward.1} parent=0 // pred_region
    _
  $region21: #{mlp_forward.1} parent=0 // pred_fallthru
    _

</llo_original>
